<compile_context>
chip_gen: v7x
topology: tpu7x:2x2x1
jax: 0.10.0
libtpu: 0.0.40
codegen_flags: <defaults>
</compile_context>

<pallas_src>
import functools
import math

import jax
import jax.numpy as jnp
from jax.experimental import pallas as pl
from jax.experimental.pallas import tpu as pltpu

_INV_SQRT2 = 1.0 / math.sqrt(2.0)


def _round_up(v, m):
    return ((v + m - 1) // m) * m


def _vmem_capacity_bytes():
    try:
        info = pltpu.get_tpu_info()
        return int(getattr(info, "vmem_capacity_bytes", 64 << 20))
    except Exception:
        return 64 << 20  # conservative (v7x-sized) fallback


# --------------------------------------------------------------------------
# Kernel body
# --------------------------------------------------------------------------
def _head_kernel(x_ref, w1_ref, b1_ref, w2_ref, b2_ref, o_ref, *, gelu_dtype):
    # fc1: (TB, d_in) @ (d_in, ff_p) on the MXU, f32 accumulation.
    h = jnp.dot(x_ref[...], w1_ref[...], preferred_element_type=jnp.float32)

    # Bias add + exact (erf) GELU — matches torch.nn.GELU() default.
    # Optionally run in bf16 on v6e/v7x (doubles VALU throughput); accuracy is
    # bounded by the bf16 cast already applied before fc2.
    h = h.astype(gelu_dtype) + b1_ref[...].astype(gelu_dtype)
    h = 0.5 * h * (1.0 + jax.lax.erf(h * _INV_SQRT2))

    # fc2: (TB, ff_p) @ (ff_p, C_p).  Padded class columns carry a -1e30 f32
    # bias so they vanish under softmax.
    logits = jnp.dot(h.astype(w2_ref.dtype), w2_ref[...],
                     preferred_element_type=jnp.float32)
    logits = logits + b2_ref[...]

    # Numerically stable softmax over the lane-dense (multiple-of-128) last dim.
    m = jnp.max(logits, axis=-1, keepdims=True)
    e = jnp.exp(logits - m)
    denom = jnp.sum(e, axis=-1, keepdims=True)
    o_ref[...] = (e * pl.reciprocal(denom, approx=False)).astype(o_ref.dtype)


# --------------------------------------------------------------------------
# One-time parameter preparation (do this at model init, not per call)
# --------------------------------------------------------------------------
def pad_head_params(w1, b1, w2, b2, *, param_dtype=None):
    """Pad fc1/fc2 params to lane-dense shapes.  Returns a params dict.

    param_dtype: e.g. jnp.bfloat16 to store the matmul operands in bf16
                 (f32 accumulation happens inside the kernel).  Biases stay
                 f32 (the -1e30 padded-class bias must not be cast to bf16).
    """
    d_in, ff = w1.shape
    num_classes = w2.shape[1]
    ff_p = max(_round_up(ff, 128), 128)
    c_p = max(_round_up(num_classes, 128), 128)
    wdt = param_dtype if param_dtype is not None else w1.dtype

    w1_p = jnp.zeros((d_in, ff_p), wdt).at[:, :ff].set(w1.astype(wdt))
    b1_p = jnp.zeros((1, ff_p), jnp.float32).at[0, :ff].set(b1.astype(jnp.float32))
    w2_p = jnp.zeros((ff_p, c_p), wdt).at[:ff, :num_classes].set(w2.astype(wdt))
    b2_p = jnp.full((1, c_p), -1e30, jnp.float32).at[0, :num_classes].set(
        b2.astype(jnp.float32))

    return dict(w1=w1_p, b1=b1_p, w2=w2_p, b2=b2_p,
                num_classes=num_classes, d_in=d_in)


# --------------------------------------------------------------------------
# Forward wrapper
# --------------------------------------------------------------------------
def classification_head(x, params, *, block_b=None, gelu_dtype=None,
                        out_dtype=None):
    """x: (B, n, embed_dim) (any float dtype; pass bf16 from the producer to
    halve DMA bytes).  params: output of pad_head_params().  Returns
    (B, num_classes) softmax probabilities."""
    w1_p, b1_p, w2_p, b2_p = params["w1"], params["b1"], params["w2"], params["b2"]
    num_classes = params["num_classes"]

    B = x.shape[0]
    x_flat = x.reshape(B, -1)                  # flatten(start_dim=1)
    d_in = x_flat.shape[1]
    assert d_in == params["d_in"], "flattened input dim mismatch"
    ff_p = w1_p.shape[1]
    c_p = w2_p.shape[1]

    out_dtype = out_dtype if out_dtype is not None else x.dtype
    gelu_dtype = gelu_dtype if gelu_dtype is not None else jnp.float32

    # ---- generation-aware sizing --------------------------------------
    cap = _vmem_capacity_bytes()
    if block_b is None:
        # 128 MiB parts (v5e/v6e): bigger tiles reach ~85% of HBM roofline.
        # 64 MiB parts (v7x): keep tiles smaller to leave pipeline headroom.
        block_b = 512 if cap >= (96 << 20) else 256

    if B < 64:
        tb = B                                   # tiny batch: one block
    else:
        # Guarantee >= 2 grid steps so the pipeline overlaps DMA with compute
        # (and so v7x can shard the batch axis across its two TensorCores).
        tb = min(block_b, _round_up(pl.cdiv(B, 2), 8))

    act_itemsize = jnp.dtype(x_flat.dtype).itemsize
    out_itemsize = jnp.dtype(out_dtype).itemsize
    resident = (w1_p.size * jnp.dtype(w1_p.dtype).itemsize
                + w2_p.size * jnp.dtype(w2_p.dtype).itemsize
                + (b1_p.size + b2_p.size) * 4)          # single-buffered

    def footprint(t):
        streamed = 2 * t * d_in * act_itemsize + 2 * t * c_p * out_itemsize
        scratch = t * ff_p * 4 + t * c_p * 4            # fc1/fc2 intermediates
        return resident + streamed + scratch

    budget = int(0.70 * cap)
    while tb != B and tb > 8 and footprint(tb) > budget:
        tb = max(8, tb // 2)

    grid_b = pl.cdiv(B, tb)                      # partial last tile is masked
    vmem_limit = int(min(max(int(1.25 * footprint(tb)), 16 << 20),
                         int(0.85 * cap)))

    kernel = functools.partial(_head_kernel, gelu_dtype=gelu_dtype)

    cost = pl.CostEstimate(
        flops=int(2 * B * (d_in * ff_p + ff_p * c_p)),
        transcendentals=int(B * (ff_p + c_p)),
        bytes_accessed=int(B * d_in * act_itemsize + resident
                           + B * c_p * out_itemsize),
    )

    out_padded = pl.pallas_call(
        kernel,
        out_shape=jax.ShapeDtypeStruct((B, c_p), out_dtype),
        grid=(grid_b,),
        in_specs=[
            # streamed activations (default double-buffered pipeline)
            pl.BlockSpec((tb, d_in), lambda i: (i, 0)),
            # VMEM-resident weights/biases: constant index, single buffer
            pl.BlockSpec((d_in, ff_p), lambda i: (0, 0),
                         pipeline_mode=pl.Buffered(1)),
            pl.BlockSpec((1, ff_p), lambda i: (0, 0),
                         pipeline_mode=pl.Buffered(1)),
            pl.BlockSpec((ff_p, c_p), lambda i: (0, 0),
                         pipeline_mode=pl.Buffered(1)),
            pl.BlockSpec((1, c_p), lambda i: (0, 0),
                         pipeline_mode=pl.Buffered(1)),
        ],
        out_specs=pl.BlockSpec((tb, c_p), lambda i: (i, 0)),
        compiler_params=pltpu.CompilerParams(
            dimension_semantics=("parallel",),
            vmem_limit_bytes=vmem_limit,
        ),
        cost_estimate=cost,
    )(x_flat, w1_p, b1_p, w2_p, b2_p)

    return out_padded[:, :num_classes]


# --------------------------------------------------------------------------
# Demo / correctness check
# --------------------------------------------------------------------------
if __name__ == "__main__":
    # Module-consistent small shapes: embed_dim=32, n=8, ff_dim=64, classes=10.
    B, n, embed_dim, ff_dim, num_classes = 2, 8, 32, 64, 10
    d_in = embed_dim * n

    key = jax.random.PRNGKey(0)
    kx, kw1, kb1, kw2, kb2, kx2, kx3 = jax.random.split(key, 7)

    # Deterministic PyTorch-style Linear init: U(-1/sqrt(fan_in), 1/sqrt(fan_in))
    lim1 = 1.0 / math.sqrt(d_in)
    lim2 = 1.0 / math.sqrt(ff_dim)
    w1 = jax.random.uniform(kw1, (d_in, ff_dim), jnp.float32, -lim1, lim1)
    b1 = jax.random.uniform(kb1, (ff_dim,), jnp.float32, -lim1, lim1)
    w2 = jax.random.uniform(kw2, (ff_dim, num_classes), jnp.float32, -lim2, lim2)
    b2 = jax.random.uniform(kb2, (num_classes,), jnp.float32, -lim2, lim2)

    def ref_fn(xin):
        xf = xin.reshape(xin.shape[0], -1)
        h = jax.nn.gelu(xf @ w1 + b1, approximate=False)
        return jax.nn.softmax(h @ w2 + b2, axis=-1)

    # Pad parameters ONCE (model-init time), not per call.
    params_f32 = pad_head_params(w1, b1, w2, b2)
    params_bf16 = pad_head_params(w1, b1, w2, b2, param_dtype=jnp.bfloat16)

    # --- Path 1: tiny batch, f32, single block -> exact match ---------------
    x = jax.random.normal(kx, (B, n, embed_dim), dtype=jnp.float32)
    out = jax.block_until_ready(classification_head(x, params_f32))
    ref = ref_fn(x)
    assert out.shape == (B, num_classes)
    assert jnp.allclose(out, ref, atol=1e-5, rtol=1e-5)
    assert jnp.allclose(jnp.sum(out, axis=-1), 1.0, atol=1e-5)

    # --- Path 2: non-divisible batch -> 2 grid steps with a masked partial
    #             last tile (no wrapper-side concat/pad), still exact f32 -----
    B3 = 70
    x3 = jax.random.normal(kx3, (B3, n, embed_dim), dtype=jnp.float32)
    out3 = jax.block_until_ready(classification_head(x3, params_f32))
    ref3 = ref_fn(x3)
    assert out3.shape == (B3, num_classes)
    assert jnp.allclose(out3, ref3, atol=1e-5, rtol=1e-5)
    assert jnp.allclose(jnp.sum(out3, axis=-1), 1.0, atol=1e-5)

    # --- Path 3: larger batch, bf16 operands emitted by the "producer",
    #             bf16 bias-add/GELU (v6e/v7x micro-opt), f32 softmax/output --
    B2 = 256
    x2_f32 = jax.random.normal(kx2, (B2, n, embed_dim), dtype=jnp.float32)
    x2_bf16 = x2_f32.astype(jnp.bfloat16)   # upstream producer emits bf16
    out2 = jax.block_until_ready(
        classification_head(x2_bf16, params_bf16,
                            gelu_dtype=jnp.bfloat16,
                            out_dtype=jnp.float32))
    ref2 = ref_fn(x2_f32)
    assert out2.shape == (B2, num_classes)
    assert jnp.allclose(out2, ref2, atol=2e-2)           # bf16 operand tolerance
    assert jnp.allclose(jnp.sum(out2, axis=-1), 1.0, atol=1e-4)

    print("KERNEL_OK")
</pallas_src>

<mosaic_0001>
module attributes {stable_mosaic.version = 11 : i64} {
  func.func @_head_kernel(%arg0: i32, %arg1: memref<2x256xf32, #tpu.memory_space<vmem>>, %arg2: memref<256x128xf32, #tpu.memory_space<vmem>>, %arg3: memref<1x128xf32, #tpu.memory_space<vmem>>, %arg4: memref<128x128xf32, #tpu.memory_space<vmem>>, %arg5: memref<1x128xf32, #tpu.memory_space<vmem>>, %arg6: memref<2x128xf32, #tpu.memory_space<vmem>>) attributes {dimension_semantics = [#tpu.dimension_semantics<parallel>], iteration_bounds = array<i64: 1>, scalar_prefetch = 0 : i64, scratch_operands = 0 : i64, tpu.core_type = #tpu.core_type<tc>, window_params = [{transform_indices = @transform_0, window_bounds = array<i64: 2, 256>}, {pipeline_mode = #tpu.pipeline_mode<synchronous>, transform_indices = @transform_1, window_bounds = array<i64: 256, 128>}, {pipeline_mode = #tpu.pipeline_mode<synchronous>, transform_indices = @transform_2, window_bounds = array<i64: 1, 128>}, {pipeline_mode = #tpu.pipeline_mode<synchronous>, transform_indices = @transform_3, window_bounds = array<i64: 128, 128>}, {pipeline_mode = #tpu.pipeline_mode<synchronous>, transform_indices = @transform_4, window_bounds = array<i64: 1, 128>}, {transform_indices = @transform_5, window_bounds = array<i64: 2, 128>}]} {
    %c0 = arith.constant 0 : index
    %c0_0 = arith.constant 0 : index
    %0 = vector.load %arg1[%c0, %c0_0] : memref<2x256xf32, #tpu.memory_space<vmem>>, vector<2x256xf32>
    %c0_1 = arith.constant 0 : index
    %c0_2 = arith.constant 0 : index
    %1 = vector.load %arg2[%c0_1, %c0_2] : memref<256x128xf32, #tpu.memory_space<vmem>>, vector<256x128xf32>
    %cst = arith.constant dense<0.000000e+00> : vector<2x128xf32>
    %2 = tpu.matmul %0, %1, %cst {dimension_numbers = #tpu.dot_dimension_numbers<[1], [0], [0], [1], [0, 0, 1, 1], [], []>} : vector<2x256xf32>, vector<256x128xf32>, vector<2x128xf32> -> vector<2x128xf32>
    %c0_3 = arith.constant 0 : index
    %c0_4 = arith.constant 0 : index
    %3 = vector.load %arg3[%c0_3, %c0_4] : memref<1x128xf32, #tpu.memory_space<vmem>>, vector<1x128xf32>
    %4 = vector.broadcast %3 : vector<1x128xf32> to vector<2x128xf32>
    %5 = arith.addf %2, %4 : vector<2x128xf32>
    %cst_5 = arith.constant 5.000000e-01 : f32
    %6 = vector.broadcast %cst_5 : f32 to vector<2x128xf32>
    %7 = arith.mulf %6, %5 : vector<2x128xf32>
    %cst_6 = arith.constant 0.707106769 : f32
    %8 = vector.broadcast %cst_6 : f32 to vector<2x128xf32>
    %9 = arith.mulf %5, %8 : vector<2x128xf32>
    %10 = math.erf %9 : vector<2x128xf32>
    %cst_7 = arith.constant 1.000000e+00 : f32
    %11 = vector.broadcast %cst_7 : f32 to vector<2x128xf32>
    %12 = arith.addf %11, %10 : vector<2x128xf32>
    %13 = arith.mulf %7, %12 : vector<2x128xf32>
    %c0_8 = arith.constant 0 : index
    %c0_9 = arith.constant 0 : index
    %14 = vector.load %arg4[%c0_8, %c0_9] : memref<128x128xf32, #tpu.memory_space<vmem>>, vector<128x128xf32>
    %cst_10 = arith.constant dense<0.000000e+00> : vector<2x128xf32>
    %15 = tpu.matmul %13, %14, %cst_10 {dimension_numbers = #tpu.dot_dimension_numbers<[1], [0], [0], [1], [0, 0, 1, 1], [], []>} : vector<2x128xf32>, vector<128x128xf32>, vector<2x128xf32> -> vector<2x128xf32>
    %c0_11 = arith.constant 0 : index
    %c0_12 = arith.constant 0 : index
    %16 = vector.load %arg5[%c0_11, %c0_12] : memref<1x128xf32, #tpu.memory_space<vmem>>, vector<1x128xf32>
    %17 = vector.broadcast %16 : vector<1x128xf32> to vector<2x128xf32>
    %18 = arith.addf %15, %17 : vector<2x128xf32>
    %cst_13 = arith.constant dense<0xFF800000> : vector<2xf32>
    %19 = vector.multi_reduction <maximumf>, %18, %cst_13 [1] : vector<2x128xf32> to vector<2xf32>
    %20 = vector.shape_cast %19 : vector<2xf32> to vector<2x1xf32>
    %21 = vector.broadcast %20 : vector<2x1xf32> to vector<2x128xf32>
    %22 = arith.subf %18, %21 : vector<2x128xf32>
    %23 = math.exp %22 : vector<2x128xf32>
    %cst_14 = arith.constant dense<0.000000e+00> : vector<2xf32>
    %24 = vector.multi_reduction <add>, %23, %cst_14 [1] : vector<2x128xf32> to vector<2xf32>
    %25 = vector.shape_cast %24 : vector<2xf32> to vector<2x1xf32>
    %26 = tpu.reciprocal %25 : vector<2x1xf32> -> vector<2x1xf32>
    %27 = vector.broadcast %26 : vector<2x1xf32> to vector<2x128xf32>
    %28 = arith.mulf %23, %27 : vector<2x128xf32>
    %c0_15 = arith.constant 0 : index
    %c0_16 = arith.constant 0 : index
    %29 = vector.load %arg6[%c0_15, %c0_16] : memref<2x128xf32, #tpu.memory_space<vmem>>, vector<2x128xf32>
    tpu.vector_store %arg6[%c0_15, %c0_16], %28 {strides = array<i32>} : memref<2x128xf32, #tpu.memory_space<vmem>>, vector<2x128xf32>,
    return
  }
  func.func @transform_0(%arg0: i32) -> (i32, i32) {
    %c0_i32 = arith.constant 0 : i32
    %c0_i32_0 = arith.constant 0 : i32
    return %arg0, %c0_i32 : i32, i32
  }
  func.func @transform_1(%arg0: i32) -> (i32, i32) {
    %c0_i32 = arith.constant 0 : i32
    %c0_i32_0 = arith.constant 0 : i32
    %c0_i32_1 = arith.constant 0 : i32
    return %c0_i32, %c0_i32_0 : i32, i32
  }
  func.func @transform_2(%arg0: i32) -> (i32, i32) {
    %c0_i32 = arith.constant 0 : i32
    %c0_i32_0 = arith.constant 0 : i32
    %c0_i32_1 = arith.constant 0 : i32
    return %c0_i32, %c0_i32_0 : i32, i32
  }
  func.func @transform_3(%arg0: i32) -> (i32, i32) {
    %c0_i32 = arith.constant 0 : i32
    %c0_i32_0 = arith.constant 0 : i32
    %c0_i32_1 = arith.constant 0 : i32
    return %c0_i32, %c0_i32_0 : i32, i32
  }
  func.func @transform_4(%arg0: i32) -> (i32, i32) {
    %c0_i32 = arith.constant 0 : i32
    %c0_i32_0 = arith.constant 0 : i32
    %c0_i32_1 = arith.constant 0 : i32
    return %c0_i32, %c0_i32_0 : i32, i32
  }
  func.func @transform_5(%arg0: i32) -> (i32, i32) {
    %c0_i32 = arith.constant 0 : i32
    %c0_i32_0 = arith.constant 0 : i32
    return %arg0, %c0_i32 : i32, i32
  }
}

</mosaic_0001>

<llo_original>
// kernel: tpu_custom_call.1
$region0: #{tpu_custom_call.1}
  #allocation0 [shape = 'u32[]', space=smem, size = 0x4, offset = 0x4, fixed_abs, tag = 'smem constant byte address 0x4 - core index']
  #allocation1 [shape = 'u32[144,128]{1,0:T(1,128)}', space=vmem, size = 0x12000, scoped, tag = 'internal scratch']
  %s0 = inlined_call_operand.hbm [shape: f32[2,256], index: 0, kind: input, shape index: {}]
  %s1 = inlined_call_operand.hbm [shape: f32[256,128], index: 1, kind: input, shape index: {}]
  %s2 = inlined_call_operand.vmem [shape: f32[1,128], index: 2, kind: input, shape index: {}]
  %s3 = inlined_call_operand.hbm [shape: f32[128,128], index: 3, kind: input, shape index: {}]
  %s4 = inlined_call_operand.vmem [shape: f32[1,128], index: 4, kind: input, shape index: {}]
  %s5 = inlined_call_operand.hbm [shape: f32[2,128], index: 5, kind: output, shape index: {}]
  %s6 = sld [smem:[#allocation0]]
  $region42: #{tpu_custom_call.1} parent=0
    _
  %s8 = ssub.s32 1, %s6
  %s9 = scalar_select 0, %s8, %s6
  $region1: #{tpu_custom_call.1} parent=0
    #allocation2 [shape = 'u8[2048]{0}', space=vmem, size = 0x800, scoped, tag = 'input window, operand 0, single buffered']
    #allocation3 [shape = 's32[1]{0}', space=sflag, size = 0x4, scoped, tag = 'scoped memory for tpu_custom_call.1']
    #allocation4 [shape = 's32[1]{0}', space=sflag, size = 0x4, scoped, tag = 'scoped memory for tpu_custom_call.1']
    #allocation5 [shape = 'u8[131072]{0}', space=vmem, size = 0x20000, scoped, tag = 'input window, operand 1, single buffered']
    #allocation6 [shape = 's32[1]{0}', space=sflag, size = 0x4, scoped, tag = 'scoped memory for tpu_custom_call.1']
    #allocation7 [shape = 'u8[65536]{0}', space=vmem, size = 0x10000, scoped, tag = 'input window, operand 3, single buffered']
    #allocation8 [shape = 'u8[1024]{0}', space=vmem, size = 0x400, scoped, tag = 'output window, operand 0, single buffered']
    %10 = vsyncpa [#allocation3], 0
    %11 = vsyncpa [#allocation6], 0
    %12 = vsyncpa [#allocation4], 0
    // Predicated region
    $region2: #{tpu_custom_call.1} parent=1 // pred_check
      _
    $region3: #{tpu_custom_call.1} parent=1 // pred_check_branch
      %14 = sbr.rel (0) target = $region5
    $region4: #{tpu_custom_call.1} parent=1 // pred_region
      %s16 = ssub.s32 64, 64
      %17 = vsyncadd [#allocation3], %s16
      %s19 = sshll.u32 [#allocation2], 4
      %s20 = int_to_ptr.vmem [resolvable:$true] %s19
      %22 = dma.hbm_to_vmem [thread:$0]  %s0, 64, %s20, [#allocation3]
    $region5: #{tpu_custom_call.1} parent=1 // pred_fallthru
      _
    // Predicated region
    $region6: #{tpu_custom_call.1} parent=1 // pred_check
      _
    $region7: #{tpu_custom_call.1} parent=1 // pred_check_branch
      %24 = sbr.rel (0) target = $region9
    $region8: #{tpu_custom_call.1} parent=1 // pred_region
      %s26 = ssub.s32 4096, 4096
      %27 = vsyncadd [#allocation6], %s26
      %s28 = sshll.u32 [#allocation5], 4
      %s29 = int_to_ptr.vmem [resolvable:$true] %s28
      %34 = dma.hbm_to_vmem [thread:$0]  %s1, 4096, %s29, [#allocation6], 128, 128, 8
    $region9: #{tpu_custom_call.1} parent=1 // pred_fallthru
      _
    // Predicated region
    $region10: #{tpu_custom_call.1} parent=1 // pred_check
      _
    $region11: #{tpu_custom_call.1} parent=1 // pred_check_branch
      %36 = sbr.rel (0) target = $region13
    $region12: #{tpu_custom_call.1} parent=1 // pred_region
      _
    $region13: #{tpu_custom_call.1} parent=1 // pred_fallthru
      _
    // Predicated region
    $region14: #{tpu_custom_call.1} parent=1 // pred_check
      _
    $region15: #{tpu_custom_call.1} parent=1 // pred_check_branch
      %38 = sbr.rel (0) target = $region17
    $region16: #{tpu_custom_call.1} parent=1 // pred_region
      %s40 = ssub.s32 2048, 2048
      %41 = vsyncadd [#allocation6], %s40
      %s42 = sshll.u32 [#allocation7], 4
      %s43 = int_to_ptr.vmem [resolvable:$true] %s42
      %48 = dma.hbm_to_vmem [thread:$0]  %s3, 2048, %s43, [#allocation6], 128, 128, 8
    $region17: #{tpu_custom_call.1} parent=1 // pred_fallthru
      _
    // Predicated region
    $region18: #{tpu_custom_call.1} parent=1 // pred_check
      _
    $region19: #{tpu_custom_call.1} parent=1 // pred_check_branch
      %50 = sbr.rel (0) target = $region21
    $region20: #{tpu_custom_call.1} parent=1 // pred_region
      _
    $region21: #{tpu_custom_call.1} parent=1 // pred_fallthru
      _
    // Predicated region
    $region22: #{tpu_custom_call.1} parent=1 // pred_check
      _
    $region23: #{tpu_custom_call.1} parent=1 // pred_check_branch
      %52 = sbr.rel (0) target = $region25
    $region24: #{tpu_custom_call.1} parent=1 // pred_region
      %53 = dma.done [#allocation3], 64
    $region25: #{tpu_custom_call.1} parent=1 // pred_fallthru
      _
    // Predicated region
    $region26: #{tpu_custom_call.1} parent=1 // pred_check
      _
    $region27: #{tpu_custom_call.1} parent=1 // pred_check_branch
      %55 = sbr.rel (0) target = $region29
    $region28: #{tpu_custom_call.1} parent=1 // pred_region
      %56 = dma.done [#allocation6], 4096
    $region29: #{tpu_custom_call.1} parent=1 // pred_fallthru
      _
    // Predicated region
    $region30: #{tpu_custom_call.1} parent=1 // pred_check
      _
    $region31: #{tpu_custom_call.1} parent=1 // pred_check_branch
      %58 = sbr.rel (0) target = $region33
    $region32: #{tpu_custom_call.1} parent=1 // pred_region
      %59 = dma.done [#allocation6], 2048
    $region33: #{tpu_custom_call.1} parent=1 // pred_fallthru
      _
    %v60 = vld [vmem:[#allocation2] sm:$0xf]
    %v61 = vld [vmem:[#allocation5] sm:$0xff]
    %v62 = vld [vmem:[#allocation5 + $0x8] sm:$0xff]
    %v63 = vld [vmem:[#allocation5 + $0x10] sm:$0xff]
    %v64 = vld [vmem:[#allocation5 + $0x18] sm:$0xff]
    %v65 = vld [vmem:[#allocation5 + $0x20] sm:$0xff]
    %v66 = vld [vmem:[#allocation5 + $0x28] sm:$0xff]
    %v67 = vld [vmem:[#allocation5 + $0x30] sm:$0xff]
    %v68 = vld [vmem:[#allocation5 + $0x38] sm:$0xff]
    %v69 = vld [vmem:[#allocation5 + $0x40] sm:$0xff]
    %v70 = vld [vmem:[#allocation5 + $0x48] sm:$0xff]
    %v71 = vld [vmem:[#allocation5 + $0x50] sm:$0xff]
    %v72 = vld [vmem:[#allocation5 + $0x58] sm:$0xff]
    %v73 = vld [vmem:[#allocation5 + $0x60] sm:$0xff]
    %v74 = vld [vmem:[#allocation5 + $0x68] sm:$0xff]
    %v75 = vld [vmem:[#allocation5 + $0x70] sm:$0xff]
    %v76 = vld [vmem:[#allocation5 + $0x78] sm:$0xff]
    %v77 = vld [vmem:[#allocation5 + $0x80] sm:$0xff]
    %v78 = vld [vmem:[#allocation5 + $0x88] sm:$0xff]
    %v79 = vld [vmem:[#allocation5 + $0x90] sm:$0xff]
    %v80 = vld [vmem:[#allocation5 + $0x98] sm:$0xff]
    %v81 = vld [vmem:[#allocation5 + $0xa0] sm:$0xff]
    %v82 = vld [vmem:[#allocation5 + $0xa8] sm:$0xff]
    %v83 = vld [vmem:[#allocation5 + $0xb0] sm:$0xff]
    %v84 = vld [vmem:[#allocation5 + $0xb8] sm:$0xff]
    %v85 = vld [vmem:[#allocation5 + $0xc0] sm:$0xff]
    %v86 = vld [vmem:[#allocation5 + $0xc8] sm:$0xff]
    %v87 = vld [vmem:[#allocation5 + $0xd0] sm:$0xff]
    %v88 = vld [vmem:[#allocation5 + $0xd8] sm:$0xff]
    %v89 = vld [vmem:[#allocation5 + $0xe0] sm:$0xff]
    %v90 = vld [vmem:[#allocation5 + $0xe8] sm:$0xff]
    %v91 = vld [vmem:[#allocation5 + $0xf0] sm:$0xff]
    %v92 = vld [vmem:[#allocation5 + $0xf8] sm:$0xff]
    %v93 = vld [vmem:[%s2] sm:$0x1]
    %v95 = vlaneseq
    %v96 = vshrl.u32 %v95, 7
    %v97 = vsub.s32 0, %v96
    %v98 = vrot.slane %v93, %v97
    %v102 = vunpack.c.l.s4 1983009808
    %v103 = vunpack.c.0.s8 %v102
    %v104 = vlaneseq
    %v105 = vshrl.u32 %v104, 7
    %v106 = vsub.s32 %v103, %v105
    %v107 = vrot.slane %v60, %v106
    %v108 = vcombine.high %v107, %v107
    %111 = vmatprep.subr.mxu0 0.0
    %112 = vmatpush1.msra.mxu0 %v61
    %113 = vmatprep.subr.mxu0 0.0
    %114 = vmatpush1.msra.mxu0 %v62
    %115 = vmatprep.subr.mxu0 0.0
    %116 = vmatpush1.msra.mxu0 %v63
    %117 = vmatprep.subr.mxu0 0.0
    %118 = vmatpush1.msra.mxu0 %v64
    %119 = vmatprep.subr.mxu0 0.0
    %120 = vmatpush1.msra.mxu0 %v65
    %121 = vmatprep.subr.mxu0 0.0
    %122 = vmatpush1.msra.mxu0 %v66
    %123 = vmatprep.subr.mxu0 0.0
    %124 = vmatpush1.msra.mxu0 %v67
    %125 = vmatprep.subr.mxu0 0.0
    %126 = vmatpush1.msra.mxu0 %v68
    %127 = vmatprep.subr.mxu0 0.0
    %128 = vmatpush1.msra.mxu0 %v69
    %129 = vmatprep.subr.mxu0 0.0
    %130 = vmatpush1.msra.mxu0 %v70
    %131 = vmatprep.subr.mxu0 0.0
    %132 = vmatpush1.msra.mxu0 %v71
    %133 = vmatprep.subr.mxu0 0.0
    %134 = vmatpush1.msra.mxu0 %v72
    %135 = vmatprep.subr.mxu0 0.0
    %136 = vmatpush1.msra.mxu0 %v73
    %137 = vmatprep.subr.mxu0 0.0
    %138 = vmatpush1.msra.mxu0 %v74
    %139 = vmatprep.subr.mxu0 0.0
    %140 = vmatpush1.msra.mxu0 %v75
    %141 = vmatprep.subr.mxu0 0.0
    %142 = vmatpush1.msra.mxu0 %v76
    %143 = vmatprep.subr.mxu0 0.0
    %144 = vmatpush1.msra.mxu0 %v77
    %145 = vmatprep.subr.mxu0 0.0
    %146 = vmatpush1.msra.mxu0 %v78
    %147 = vmatprep.subr.mxu0 0.0
    %148 = vmatpush1.msra.mxu0 %v79
    %149 = vmatprep.subr.mxu0 0.0
    %150 = vmatpush1.msra.mxu0 %v80
    %151 = vmatprep.subr.mxu0 0.0
    %152 = vmatpush1.msra.mxu0 %v81
    %153 = vmatprep.subr.mxu0 0.0
    %154 = vmatpush1.msra.mxu0 %v82
    %155 = vmatprep.subr.mxu0 0.0
    %156 = vmatpush1.msra.mxu0 %v83
    %157 = vmatprep.subr.mxu0 0.0
    %158 = vmatpush1.msra.mxu0 %v84
    %159 = vmatprep.subr.mxu0 0.0
    %160 = vmatpush1.msra.mxu0 %v85
    %161 = vmatprep.subr.mxu0 0.0
    %162 = vmatpush1.msra.mxu0 %v86
    %163 = vmatprep.subr.mxu0 0.0
    %164 = vmatpush1.msra.mxu0 %v87
    %165 = vmatprep.subr.mxu0 0.0
    %166 = vmatpush1.msra.mxu0 %v88
    %167 = vmatprep.subr.mxu0 0.0
    %168 = vmatpush1.msra.mxu0 %v89
    %169 = vmatprep.subr.mxu0 0.0
    %170 = vmatpush1.msra.mxu0 %v90
    %171 = vmatprep.subr.mxu0 0.0
    %172 = vmatpush1.msra.mxu0 %v91
    %173 = vmatprep.subr.mxu0 0.0
    %174 = vmatpush1.msra.mxu0 %v92
    %175 = vmatprep.mubr.f32.mxu0 %v108
    %176 = vmatmul.mubr.f32.gmra.mrb[0].mxu0 %v107
    %v177 = vpop.f32.mrb[0].mxu0
    %v178 = vadd.f32 %v98, %v177
    %v179 = vpop.f32.mrb[0].mxu0
    %180 = vdwg.mxu0
    %v181 = vmul.f32 %v178, 0.5
    %v182 = vmul.f32 %v178, 0.70710677
    %v183 = verf.f32.pop %v182
    %v184 = vadd.f32 %v183, 1.0
    %v185 = vmul.f32 %v181, %v184
    %v186 = vld [vmem:[#allocation7] sm:$0xff]
    %v187 = vld [vmem:[#allocation7 + $0x8] sm:$0xff]
    %v188 = vld [vmem:[#allocation7 + $0x10] sm:$0xff]
    %v189 = vld [vmem:[#allocation7 + $0x18] sm:$0xff]
    %v190 = vld [vmem:[#allocation7 + $0x20] sm:$0xff]
    %v191 = vld [vmem:[#allocation7 + $0x28] sm:$0xff]
    %v192 = vld [vmem:[#allocation7 + $0x30] sm:$0xff]
    %v193 = vld [vmem:[#allocation7 + $0x38] sm:$0xff]
    %v194 = vld [vmem:[#allocation7 + $0x40] sm:$0xff]
    %v195 = vld [vmem:[#allocation7 + $0x48] sm:$0xff]
    %v196 = vld [vmem:[#allocation7 + $0x50] sm:$0xff]
    %v197 = vld [vmem:[#allocation7 + $0x58] sm:$0xff]
    %v198 = vld [vmem:[#allocation7 + $0x60] sm:$0xff]
    %v199 = vld [vmem:[#allocation7 + $0x68] sm:$0xff]
    %v200 = vld [vmem:[#allocation7 + $0x70] sm:$0xff]
    %v201 = vld [vmem:[#allocation7 + $0x78] sm:$0xff]
    %v202 = vld [vmem:[%s4] sm:$0x1]
    %v204 = vlaneseq
    %v205 = vshrl.u32 %v204, 7
    %v206 = vsub.s32 0, %v205
    %v207 = vrot.slane %v202, %v206
    %209 = vmatprep.subr.mxu0 0.0
    %210 = vmatpush1.msra.mxu0 %v186
    %211 = vmatprep.subr.mxu0 0.0
    %212 = vmatpush1.msra.mxu0 %v187
    %213 = vmatprep.subr.mxu0 0.0
    %214 = vmatpush1.msra.mxu0 %v188
    %215 = vmatprep.subr.mxu0 0.0
    %216 = vmatpush1.msra.mxu0 %v189
    %217 = vmatprep.subr.mxu0 0.0
    %218 = vmatpush1.msra.mxu0 %v190
    %219 = vmatprep.subr.mxu0 0.0
    %220 = vmatpush1.msra.mxu0 %v191
    %221 = vmatprep.subr.mxu0 0.0
    %222 = vmatpush1.msra.mxu0 %v192
    %223 = vmatprep.subr.mxu0 0.0
    %224 = vmatpush1.msra.mxu0 %v193
    %225 = vmatprep.subr.mxu0 0.0
    %226 = vmatpush1.msra.mxu0 %v194
    %227 = vmatprep.subr.mxu0 0.0
    %228 = vmatpush1.msra.mxu0 %v195
    %229 = vmatprep.subr.mxu0 0.0
    %230 = vmatpush1.msra.mxu0 %v196
    %231 = vmatprep.subr.mxu0 0.0
    %232 = vmatpush1.msra.mxu0 %v197
    %233 = vmatprep.subr.mxu0 0.0
    %234 = vmatpush1.msra.mxu0 %v198
    %235 = vmatprep.subr.mxu0 0.0
    %236 = vmatpush1.msra.mxu0 %v199
    %237 = vmatprep.subr.mxu0 0.0
    %238 = vmatpush1.msra.mxu0 %v200
    %239 = vmatprep.subr.mxu0 0.0
    %240 = vmatpush1.msra.mxu0 %v201
    %241 = vmatprep.subr.mxu0 0.0
    %242 = vmatpush1.msra.mxu0 0.0
    %243 = vmatprep.subr.mxu0 0.0
    %244 = vmatpush1.msra.mxu0 0.0
    %245 = vmatprep.subr.mxu0 0.0
    %246 = vmatpush1.msra.mxu0 0.0
    %247 = vmatprep.subr.mxu0 0.0
    %248 = vmatpush1.msra.mxu0 0.0
    %249 = vmatprep.subr.mxu0 0.0
    %250 = vmatpush1.msra.mxu0 0.0
    %251 = vmatprep.subr.mxu0 0.0
    %252 = vmatpush1.msra.mxu0 0.0
    %253 = vmatprep.subr.mxu0 0.0
    %254 = vmatpush1.msra.mxu0 0.0
    %255 = vmatprep.subr.mxu0 0.0
    %256 = vmatpush1.msra.mxu0 0.0
    %257 = vmatprep.subr.mxu0 0.0
    %258 = vmatpush1.msra.mxu0 0.0
    %259 = vmatprep.subr.mxu0 0.0
    %260 = vmatpush1.msra.mxu0 0.0
    %261 = vmatprep.subr.mxu0 0.0
    %262 = vmatpush1.msra.mxu0 0.0
    %263 = vmatprep.subr.mxu0 0.0
    %264 = vmatpush1.msra.mxu0 0.0
    %265 = vmatprep.subr.mxu0 0.0
    %266 = vmatpush1.msra.mxu0 0.0
    %267 = vmatprep.subr.mxu0 0.0
    %268 = vmatpush1.msra.mxu0 0.0
    %269 = vmatprep.subr.mxu0 0.0
    %270 = vmatpush1.msra.mxu0 0.0
    %271 = vmatprep.subr.mxu0 0.0
    %272 = vmatpush1.msra.mxu0 0.0
    %273 = vmatprep.mubr.f32.mxu0 0.0
    %274 = vmatmul.mubr.f32.gmra.mrb[0].mxu0 %v185
    %v275 = vpop.f32.mrb[0].mxu0
    %v276 = vadd.f32 %v207, %v275
    %v277 = vpop.f32.mrb[0].mxu0
    %278 = vdwg.mxu0
    %vm279 = vcmask 1041408
    %v280 = vsel %vm279, %v276, -inf
    %281 = vmax.xlane.f32.xlu0 %v280
    %v282 = vpop.xlane.xlu0 %281
    %v283 = vsub.f32 %v276, %v282
    %v284 = vmul.f32 %v283, 1.442695
    %v285 = vpow.pop %v284
    %v286 = vsel %vm279, %v285, 0.0
    %287 = vadd.xlane.f32.xlu0 %v286
    %v288 = vpop.xlane.xlu0 %287
    %v289 = vrcp.pop %v288
    %v290 = vmul.f32 %v285, %v289
    %291 = vst [vmem:[#allocation8] sm:$0x3] %v290
    // Predicated region
    $region34: #{tpu_custom_call.1} parent=1 // pred_check
      _
    $region35: #{tpu_custom_call.1} parent=1 // pred_check_branch
      %293 = sbr.rel (0) target = $region37
    $region36: #{tpu_custom_call.1} parent=1 // pred_region
      %s295 = ssub.s32 32, 32
      %296 = vsyncadd [#allocation4], %s295
      %s298 = sshll.u32 [#allocation8], 4
      %s299 = int_to_ptr.vmem [resolvable:$true] %s298
      %301 = dma.vmem_to_hbm [thread:$0]  %s299, 32, %s5, [#allocation4]
    $region37: #{tpu_custom_call.1} parent=1 // pred_fallthru
      _
    // Predicated region
    $region38: #{tpu_custom_call.1} parent=1 // pred_check
      _
    $region39: #{tpu_custom_call.1} parent=1 // pred_check_branch
      %303 = sbr.rel (0) target = $region41
    $region40: #{tpu_custom_call.1} parent=1 // pred_region
      %304 = dma.done [#allocation4], 32
    $region41: #{tpu_custom_call.1} parent=1 // pred_fallthru
      _
    %305 = vsyncpa [#allocation3], 1
    %306 = vsyncpa [#allocation6], 1
    %307 = vsyncpa [#allocation4], 1

</llo_original>
